<compile_context>
chip_gen: v6e
topology: v6e:2x2x1
jax: 0.10.0
libtpu: 0.0.40
codegen_flags: <defaults>
</compile_context>

<pallas_src>
import jax
import jax.numpy as jnp
from jax.experimental import pallas as pl
from jax.experimental.pallas import tpu as pltpu


def _round_up(x: int, m: int) -> int:
    return ((x + m - 1) // m) * m


def _critic_kernel(s_ref, a_ref, w1s_ref, w1a_ref, b1_ref,
                   w2_ref, b2_ref, w3_ref, b3_ref, o_ref):
    """One Q-net (selected by grid axis 0) on one batch tile (grid axis 1)."""
    s = s_ref[...].astype(jnp.bfloat16)
    a = a_ref[...].astype(jnp.bfloat16)
    # Layer 1: split matmul over the (state, action) halves of W1 (no concat).
    h1 = (jnp.dot(s, w1s_ref[...], preferred_element_type=jnp.float32)
          + jnp.dot(a, w1a_ref[...], preferred_element_type=jnp.float32)
          + b1_ref[...])
    h1 = jnp.maximum(h1, 0.0).astype(jnp.bfloat16)
    # Layer 2.
    h2 = jnp.dot(h1, w2_ref[...], preferred_element_type=jnp.float32) + b2_ref[...]
    h2 = jnp.maximum(h2, 0.0).astype(jnp.bfloat16)
    # Layer 3 (output columns are zero-padded to a lane-dense width).
    out = jnp.dot(h2, w3_ref[...], preferred_element_type=jnp.float32) + b3_ref[...]
    o_ref[...] = out.astype(o_ref.dtype)


def make_critic_params(key, observation_size, num_actions, hidden_size=(256, 256)):
    """Build stacked ([2, ...]) parameters mimicking torch.nn.Linear default init."""
    in_dim = observation_size + num_actions
    out_dim = 1 + 1 + observation_size
    out_pad = _round_up(out_dim, 128)
    h1, h2 = hidden_size

    def init_linear(k, i, o, o_store=None):
        o_store = o if o_store is None else o_store
        kw, kb = jax.random.split(k)
        bound = 1.0 / float(i) ** 0.5
        w = jax.random.uniform(kw, (i, o), jnp.float32, -bound, bound)
        b = jax.random.uniform(kb, (1, o), jnp.float32, -bound, bound)
        if o_store != o:
            w = jnp.pad(w, ((0, 0), (0, o_store - o)))
            b = jnp.pad(b, ((0, 0), (0, o_store - o)))
        return w, b

    keys = jax.random.split(key, 6)
    w1l, b1l, w2l, b2l, w3l, b3l = [], [], [], [], [], []
    for q in range(2):
        w1, b1 = init_linear(keys[3 * q + 0], in_dim, h1)
        w2, b2 = init_linear(keys[3 * q + 1], h1, h2)
        w3, b3 = init_linear(keys[3 * q + 2], h2, out_dim, out_pad)
        w1l.append(w1); b1l.append(b1)
        w2l.append(w2); b2l.append(b2)
        w3l.append(w3); b3l.append(b3)

    w1 = jnp.stack(w1l)                                      # [2, in_dim, h1]
    w1s = w1[:, :observation_size, :].astype(jnp.bfloat16)   # [2, obs, h1]
    w1a = w1[:, observation_size:, :].astype(jnp.bfloat16)   # [2, act, h1]
    b1 = jnp.stack(b1l)                                       # [2, 1, h1]   f32
    w2 = jnp.stack(w2l).astype(jnp.bfloat16)                  # [2, h1, h2]
    b2 = jnp.stack(b2l)                                       # [2, 1, h2]   f32
    w3 = jnp.stack(w3l).astype(jnp.bfloat16)                  # [2, h2, out_pad]
    b3 = jnp.stack(b3l)                                       # [2, 1, out_pad] f32
    return (w1s, w1a, b1, w2, b2, w3, b3)


@jax.jit
def critic_forward(state, action, params):
    """Equivalent of Critic.forward(state, action) -> (Q1_out, Q2_out)."""
    w1s, w1a, b1, w2, b2, w3, b3 = params
    B, obs = state.shape
    act = action.shape[1]
    h1 = w1s.shape[2]
    h2 = w2.shape[2]
    out_pad = w3.shape[2]
    out_dim = 1 + 1 + obs

    # Batch tiling: cap tiles at 256 rows, then shrink the per-tile row count to
    # the sublane-aligned minimum that covers B (minimizes padded/wasted rows).
    max_tile = 256
    n_bt = -(-B // max_tile)                # number of batch tiles
    tb = _round_up(-(-B // n_bt), 8)        # rows per tile, sublane aligned
    b_pad = tb * n_bt
    if b_pad != B:
        state = jnp.pad(state, ((0, b_pad - B), (0, 0)))
        action = jnp.pad(action, ((0, b_pad - B), (0, 0)))

    def q_spec(shape):  # per-Q-net parameter: block index fixed along batch axis
        return pl.BlockSpec((None,) + shape, lambda q, bt: (q, 0, 0))

    flops = 2 * 2 * b_pad * ((obs + act) * h1 + h1 * h2 + h2 * out_pad)
    bytes_accessed = (
        2 * b_pad * (obs + act) * 4                               # state/action (read per Q)
        + (w1s.size + w1a.size + w2.size + w3.size) * 2           # bf16 weights
        + (b1.size + b2.size + b3.size) * 4                       # f32 biases
        + 2 * b_pad * out_pad * 4                                 # f32 outputs
    )

    out = pl.pallas_call(
        _critic_kernel,
        out_shape=jax.ShapeDtypeStruct((2, b_pad, out_pad), jnp.float32),
        grid=(2, n_bt),
        in_specs=[
            pl.BlockSpec((tb, obs), lambda q, bt: (bt, 0)),
            pl.BlockSpec((tb, act), lambda q, bt: (bt, 0)),
            q_spec((obs, h1)),
            q_spec((act, h1)),
            q_spec((1, h1)),
            q_spec((h1, h2)),
            q_spec((1, h2)),
            q_spec((h2, out_pad)),
            q_spec((1, out_pad)),
        ],
        out_specs=pl.BlockSpec((None, tb, out_pad), lambda q, bt: (q, bt, 0)),
        compiler_params=pltpu.CompilerParams(
            dimension_semantics=("parallel", "parallel")),
        cost_estimate=pl.CostEstimate(
            flops=flops, transcendentals=0, bytes_accessed=bytes_accessed),
    )(state, action, w1s, w1a, b1, w2, b2, w3, b3)

    out = out[:, :B, :out_dim]
    return out[0], out[1]


if __name__ == "__main__":
    observation_size = 16
    num_actions = 8
    hidden_size = (32, 32)
    batch = 2

    key = jax.random.PRNGKey(0)
    k_params, k_state, k_action = jax.random.split(key, 3)

    params = make_critic_params(k_params, observation_size, num_actions, hidden_size)

    state = jax.random.normal(k_state, (batch, observation_size), jnp.float32)
    action = jax.random.normal(k_action, (batch, num_actions), jnp.float32)

    out1, out2 = critic_forward(state, action, params)
    jax.block_until_ready((out1, out2))

    # Plain-JAX reference following the same bf16-weight / f32-accumulation path.
    def ref_q(s, a, q):
        w1s, w1a, b1, w2, b2, w3, b3 = params
        sb = s.astype(jnp.bfloat16)
        ab = a.astype(jnp.bfloat16)
        h = (jnp.dot(sb, w1s[q], preferred_element_type=jnp.float32)
             + jnp.dot(ab, w1a[q], preferred_element_type=jnp.float32) + b1[q])
        h = jnp.maximum(h, 0.0).astype(jnp.bfloat16)
        h = jnp.dot(h, w2[q], preferred_element_type=jnp.float32) + b2[q]
        h = jnp.maximum(h, 0.0).astype(jnp.bfloat16)
        return jnp.dot(h, w3[q], preferred_element_type=jnp.float32) + b3[q]

    out_dim = 1 + 1 + observation_size
    ref1 = ref_q(state, action, 0)[:, :out_dim]
    ref2 = ref_q(state, action, 1)[:, :out_dim]

    assert out1.shape == (batch, out_dim)
    assert out2.shape == (batch, out_dim)
    assert jnp.allclose(out1, ref1, atol=2e-3, rtol=2e-3), "Q1 mismatch"
    assert jnp.allclose(out2, ref2, atol=2e-3, rtol=2e-3), "Q2 mismatch"

    print("KERNEL_OK")
</pallas_src>

<mosaic_0001>
module attributes {stable_mosaic.version = 11 : i64} {
  func.func @_critic_kernel(%arg0: i32, %arg1: i32, %arg2: memref<8x16xf32, #tpu.memory_space<vmem>>, %arg3: memref<8x8xf32, #tpu.memory_space<vmem>>, %arg4: memref<1x16x32xbf16, #tpu.memory_space<vmem>>, %arg5: memref<1x8x32xbf16, #tpu.memory_space<vmem>>, %arg6: memref<1x1x32xf32, #tpu.memory_space<vmem>>, %arg7: memref<1x32x32xbf16, #tpu.memory_space<vmem>>, %arg8: memref<1x1x32xf32, #tpu.memory_space<vmem>>, %arg9: memref<1x32x128xbf16, #tpu.memory_space<vmem>>, %arg10: memref<1x1x128xf32, #tpu.memory_space<vmem>>, %arg11: memref<1x8x128xf32, #tpu.memory_space<vmem>>) attributes {dimension_semantics = [#tpu.dimension_semantics<parallel>, #tpu.dimension_semantics<parallel>], iteration_bounds = array<i64: 2, 1>, scalar_prefetch = 0 : i64, scratch_operands = 0 : i64, tpu.core_type = #tpu.core_type<tc>, window_params = [{transform_indices = @transform_0, window_bounds = array<i64: 8, 16>}, {transform_indices = @transform_1, window_bounds = array<i64: 8, 8>}, {transform_indices = @transform_2, window_bounds = array<i64: 1, 16, 32>}, {transform_indices = @transform_3, window_bounds = array<i64: 1, 8, 32>}, {transform_indices = @transform_4, window_bounds = array<i64: 1, 1, 32>}, {transform_indices = @transform_5, window_bounds = array<i64: 1, 32, 32>}, {transform_indices = @transform_6, window_bounds = array<i64: 1, 1, 32>}, {transform_indices = @transform_7, window_bounds = array<i64: 1, 32, 128>}, {transform_indices = @transform_8, window_bounds = array<i64: 1, 1, 128>}, {transform_indices = @transform_9, window_bounds = array<i64: 1, 8, 128>}]} {
    %c0 = arith.constant 0 : index
    %c0_0 = arith.constant 0 : index
    %0 = vector.load %arg2[%c0, %c0_0] : memref<8x16xf32, #tpu.memory_space<vmem>>, vector<8x16xf32>
    %1 = arith.truncf %0 : vector<8x16xf32> to vector<8x16xbf16>
    %c0_1 = arith.constant 0 : index
    %c0_2 = arith.constant 0 : index
    %2 = vector.load %arg3[%c0_1, %c0_2] : memref<8x8xf32, #tpu.memory_space<vmem>>, vector<8x8xf32>
    %3 = arith.truncf %2 : vector<8x8xf32> to vector<8x8xbf16>
    %c0_3 = arith.constant 0 : index
    %c0_4 = arith.constant 0 : index
    %c0_5 = arith.constant 0 : index
    %4 = vector.load %arg4[%c0_3, %c0_4, %c0_5] : memref<1x16x32xbf16, #tpu.memory_space<vmem>>, vector<1x16x32xbf16>
    %5 = vector.shape_cast %4 : vector<1x16x32xbf16> to vector<16x32xbf16>
    %cst = arith.constant dense<0.000000e+00> : vector<8x32xf32>
    %6 = tpu.matmul %1, %5, %cst {dimension_numbers = #tpu.dot_dimension_numbers<[1], [0], [0], [1], [0, 0, 1, 1], [], []>} : vector<8x16xbf16>, vector<16x32xbf16>, vector<8x32xf32> -> vector<8x32xf32>
    %c0_6 = arith.constant 0 : index
    %c0_7 = arith.constant 0 : index
    %c0_8 = arith.constant 0 : index
    %7 = vector.load %arg5[%c0_6, %c0_7, %c0_8] : memref<1x8x32xbf16, #tpu.memory_space<vmem>>, vector<1x8x32xbf16>
    %8 = vector.shape_cast %7 : vector<1x8x32xbf16> to vector<8x32xbf16>
    %cst_9 = arith.constant dense<0.000000e+00> : vector<8x32xf32>
    %9 = tpu.matmul %3, %8, %cst_9 {dimension_numbers = #tpu.dot_dimension_numbers<[1], [0], [0], [1], [0, 0, 1, 1], [], []>} : vector<8x8xbf16>, vector<8x32xbf16>, vector<8x32xf32> -> vector<8x32xf32>
    %10 = arith.addf %6, %9 : vector<8x32xf32>
    %c0_10 = arith.constant 0 : index
    %c0_11 = arith.constant 0 : index
    %c0_12 = arith.constant 0 : index
    %11 = vector.load %arg6[%c0_10, %c0_11, %c0_12] : memref<1x1x32xf32, #tpu.memory_space<vmem>>, vector<1x1x32xf32>
    %12 = vector.shape_cast %11 : vector<1x1x32xf32> to vector<1x32xf32>
    %13 = vector.broadcast %12 : vector<1x32xf32> to vector<8x32xf32>
    %14 = arith.addf %10, %13 : vector<8x32xf32>
    %cst_13 = arith.constant 0.000000e+00 : f32
    %15 = vector.broadcast %cst_13 : f32 to vector<8x32xf32>
    %16 = arith.maximumf %14, %15 : vector<8x32xf32>
    %17 = arith.truncf %16 : vector<8x32xf32> to vector<8x32xbf16>
    %c0_14 = arith.constant 0 : index
    %c0_15 = arith.constant 0 : index
    %c0_16 = arith.constant 0 : index
    %18 = vector.load %arg7[%c0_14, %c0_15, %c0_16] : memref<1x32x32xbf16, #tpu.memory_space<vmem>>, vector<1x32x32xbf16>
    %19 = vector.shape_cast %18 : vector<1x32x32xbf16> to vector<32x32xbf16>
    %cst_17 = arith.constant dense<0.000000e+00> : vector<8x32xf32>
    %20 = tpu.matmul %17, %19, %cst_17 {dimension_numbers = #tpu.dot_dimension_numbers<[1], [0], [0], [1], [0, 0, 1, 1], [], []>} : vector<8x32xbf16>, vector<32x32xbf16>, vector<8x32xf32> -> vector<8x32xf32>
    %c0_18 = arith.constant 0 : index
    %c0_19 = arith.constant 0 : index
    %c0_20 = arith.constant 0 : index
    %21 = vector.load %arg8[%c0_18, %c0_19, %c0_20] : memref<1x1x32xf32, #tpu.memory_space<vmem>>, vector<1x1x32xf32>
    %22 = vector.shape_cast %21 : vector<1x1x32xf32> to vector<1x32xf32>
    %23 = vector.broadcast %22 : vector<1x32xf32> to vector<8x32xf32>
    %24 = arith.addf %20, %23 : vector<8x32xf32>
    %cst_21 = arith.constant 0.000000e+00 : f32
    %25 = vector.broadcast %cst_21 : f32 to vector<8x32xf32>
    %26 = arith.maximumf %24, %25 : vector<8x32xf32>
    %27 = arith.truncf %26 : vector<8x32xf32> to vector<8x32xbf16>
    %c0_22 = arith.constant 0 : index
    %c0_23 = arith.constant 0 : index
    %c0_24 = arith.constant 0 : index
    %28 = vector.load %arg9[%c0_22, %c0_23, %c0_24] : memref<1x32x128xbf16, #tpu.memory_space<vmem>>, vector<1x32x128xbf16>
    %29 = vector.shape_cast %28 : vector<1x32x128xbf16> to vector<32x128xbf16>
    %cst_25 = arith.constant dense<0.000000e+00> : vector<8x128xf32>
    %30 = tpu.matmul %27, %29, %cst_25 {dimension_numbers = #tpu.dot_dimension_numbers<[1], [0], [0], [1], [0, 0, 1, 1], [], []>} : vector<8x32xbf16>, vector<32x128xbf16>, vector<8x128xf32> -> vector<8x128xf32>
    %c0_26 = arith.constant 0 : index
    %c0_27 = arith.constant 0 : index
    %c0_28 = arith.constant 0 : index
    %31 = vector.load %arg10[%c0_26, %c0_27, %c0_28] : memref<1x1x128xf32, #tpu.memory_space<vmem>>, vector<1x1x128xf32>
    %32 = vector.shape_cast %31 : vector<1x1x128xf32> to vector<1x128xf32>
    %33 = vector.broadcast %32 : vector<1x128xf32> to vector<8x128xf32>
    %34 = arith.addf %30, %33 : vector<8x128xf32>
    %c0_29 = arith.constant 0 : index
    %c0_30 = arith.constant 0 : index
    %c0_31 = arith.constant 0 : index
    %35 = vector.load %arg11[%c0_29, %c0_30, %c0_31] : memref<1x8x128xf32, #tpu.memory_space<vmem>>, vector<1x8x128xf32>
    %36 = vector.shape_cast %35 : vector<1x8x128xf32> to vector<8x128xf32>
    %37 = vector.shape_cast %34 : vector<8x128xf32> to vector<1x8x128xf32>
    tpu.vector_store %arg11[%c0_29, %c0_30, %c0_31], %37 {strides = array<i32>} : memref<1x8x128xf32, #tpu.memory_space<vmem>>, vector<1x8x128xf32>,
    return
  }
  func.func @transform_0(%arg0: i32, %arg1: i32) -> (i32, i32) {
    %c0_i32 = arith.constant 0 : i32
    %c0_i32_0 = arith.constant 0 : i32
    return %arg1, %c0_i32 : i32, i32
  }
  func.func @transform_1(%arg0: i32, %arg1: i32) -> (i32, i32) {
    %c0_i32 = arith.constant 0 : i32
    %c0_i32_0 = arith.constant 0 : i32
    return %arg1, %c0_i32 : i32, i32
  }
  func.func @transform_2(%arg0: i32, %arg1: i32) -> (i32, i32, i32) {
    %c0_i32 = arith.constant 0 : i32
    %c0_i32_0 = arith.constant 0 : i32
    %c0_i32_1 = arith.constant 0 : i32
    return %arg0, %c0_i32, %c0_i32_0 : i32, i32, i32
  }
  func.func @transform_3(%arg0: i32, %arg1: i32) -> (i32, i32, i32) {
    %c0_i32 = arith.constant 0 : i32
    %c0_i32_0 = arith.constant 0 : i32
    %c0_i32_1 = arith.constant 0 : i32
    return %arg0, %c0_i32, %c0_i32_0 : i32, i32, i32
  }
  func.func @transform_4(%arg0: i32, %arg1: i32) -> (i32, i32, i32) {
    %c0_i32 = arith.constant 0 : i32
    %c0_i32_0 = arith.constant 0 : i32
    %c0_i32_1 = arith.constant 0 : i32
    return %arg0, %c0_i32, %c0_i32_0 : i32, i32, i32
  }
  func.func @transform_5(%arg0: i32, %arg1: i32) -> (i32, i32, i32) {
    %c0_i32 = arith.constant 0 : i32
    %c0_i32_0 = arith.constant 0 : i32
    %c0_i32_1 = arith.constant 0 : i32
    return %arg0, %c0_i32, %c0_i32_0 : i32, i32, i32
  }
  func.func @transform_6(%arg0: i32, %arg1: i32) -> (i32, i32, i32) {
    %c0_i32 = arith.constant 0 : i32
    %c0_i32_0 = arith.constant 0 : i32
    %c0_i32_1 = arith.constant 0 : i32
    return %arg0, %c0_i32, %c0_i32_0 : i32, i32, i32
  }
  func.func @transform_7(%arg0: i32, %arg1: i32) -> (i32, i32, i32) {
    %c0_i32 = arith.constant 0 : i32
    %c0_i32_0 = arith.constant 0 : i32
    %c0_i32_1 = arith.constant 0 : i32
    return %arg0, %c0_i32, %c0_i32_0 : i32, i32, i32
  }
  func.func @transform_8(%arg0: i32, %arg1: i32) -> (i32, i32, i32) {
    %c0_i32 = arith.constant 0 : i32
    %c0_i32_0 = arith.constant 0 : i32
    %c0_i32_1 = arith.constant 0 : i32
    return %arg0, %c0_i32, %c0_i32_0 : i32, i32, i32
  }
  func.func @transform_9(%arg0: i32, %arg1: i32) -> (i32, i32, i32) {
    %c0_i32 = arith.constant 0 : i32
    %c0_i32_0 = arith.constant 0 : i32
    return %arg0, %arg1, %c0_i32 : i32, i32, i32
  }
}

</mosaic_0001>

<llo_original>
// kernel: critic_forward.1
$region0: #{critic_forward.1}
  #allocation0 [shape = 'u32[]', space=smem, size = 0x4, offset = 0x4, fixed_abs, tag = 'smem constant byte address 0x4 - core index']
  #allocation1 [shape = 'u32[144,128]{1,0:T(1,128)}', space=vmem, size = 0x12000, scoped, tag = 'internal scratch']
  %s0 = inlined_call_operand.vmem [shape: f32[8,16], index: 0, kind: input, shape index: {}]
  %s1 = inlined_call_operand.vmem [shape: f32[8,8], index: 1, kind: input, shape index: {}]
  %s2 = inlined_call_operand.hbm [shape: bf16[2,16,32], index: 2, kind: input, shape index: {}]
  %s3 = inlined_call_operand.hbm [shape: bf16[2,8,32], index: 3, kind: input, shape index: {}]
  %s4 = inlined_call_operand.vmem [shape: f32[2,1,32], index: 4, kind: input, shape index: {}]
  %s5 = inlined_call_operand.hbm [shape: bf16[2,32,32], index: 5, kind: input, shape index: {}]
  %s6 = inlined_call_operand.hbm [shape: f32[2,1,32], index: 6, kind: input, shape index: {}]
  %s7 = inlined_call_operand.vmem [shape: bf16[2,32,128], index: 7, kind: input, shape index: {}]
  %s8 = inlined_call_operand.vmem [shape: f32[2,1,128], index: 8, kind: input, shape index: {}]
  %s9 = inlined_call_operand.vmem [shape: f32[2,8,128], index: 9, kind: output, shape index: {}]
  %s10 = sld [smem:[#allocation0]]
  $region85: #{critic_forward.1} parent=0
    _
  %s12 = ssub.s32 1, %s10
  %s13 = scalar_select 0, %s12, %s10
  $region1: #{critic_forward.1} parent=0
    #allocation2 [shape = 'u8[8192]{0}', space=vmem, size = 0x2000, scoped, tag = 'input window, operand 2']
    #allocation3 [shape = 's32[2]{0}', space=sflag, size = 0x8, scoped, tag = 'scoped memory for critic_forward.1']
    #allocation4 [shape = 'u8[4096]{0}', space=vmem, size = 0x1000, scoped, tag = 'input window, operand 3']
    #allocation5 [shape = 's32[2]{0}', space=sflag, size = 0x8, scoped, tag = 'scoped memory for critic_forward.1']
    #allocation6 [shape = 'u8[16384]{0}', space=vmem, size = 0x4000, scoped, tag = 'input window, operand 5']
    #allocation7 [shape = 'u8[1024]{0}', space=vmem, size = 0x400, scoped, tag = 'input window, operand 6']
    #allocation8 [shape = 's32[2]{0}', space=sflag, size = 0x8, scoped, tag = 'scoped memory for critic_forward.1']
    %14 = vsyncpa [#allocation3], 0
    %s15 = scalar_lea.sflag [#allocation3], 1
    %16 = vsyncpa %s15, 0
    %17 = vsyncpa [#allocation5], 0
    %s18 = scalar_lea.sflag [#allocation5], 1
    %19 = vsyncpa %s18, 0
    %20 = vsyncpa [#allocation8], 0
    %s21 = scalar_lea.sflag [#allocation8], 1
    %22 = vsyncpa %s21, 0
    loop: start=0, step=1, limit=4
    $region2: #{critic_forward.1} parent=1 // loop_pre_header
      _
    $region3: #{critic_forward.1} parent=1 // loop_header
      %s24 = sphi 0, %s28
      %p25 = scmp.ge.s32.totalorder %s24, 4
      %s31 = sphi 0, %s43
      %s32 = sphi 0, %s39
      %s33 = sphi 0, %s31
      %s34 = sphi 0, %s32
      %s35 = sphi 0, %s33
      %s36 = sphi 0, %s34
      %s46 = sphi 0, %s48
      %s49 = sphi 0, %s46
      %s50 = sphi 0, %s49
      %s66 = sphi 0, %s50
      %s72 = sphi 0, %s74
      %s75 = sphi 0, %s72
      %s76 = sphi 0, %s75
      %s92 = sphi 0, %s76
      %s98 = sphi 0, %s100
      %s101 = sphi 0, %s98
      %s102 = sphi 0, %s101
      %s118 = sphi 0, %s102
      %s124 = sphi 0, %s126
      %s127 = sphi 0, %s124
      %s128 = sphi 0, %s127
      %s144 = sphi 0, %s128
      %s150 = sphi 0, %s152
      %s153 = sphi 0, %s150
      %s154 = sphi 0, %s153
      %s170 = sphi 0, %s154
      %s176 = sphi 0, %s178
      %s179 = sphi 0, %s176
      %s180 = sphi 0, %s179
      %s196 = sphi 0, %s180
      %s202 = sphi 0, %s204
      %s205 = sphi 0, %s202
      %s206 = sphi 0, %s205
      %s222 = sphi 0, %s206
      %s228 = sphi 0, %s230
      %s231 = sphi 0, %s228
      %s232 = sphi 0, %s231
      %s248 = sphi 0, %s232
      %s254 = sphi 0, %s256
      %s257 = sphi 0, %s254
      %s258 = sphi 0, %s257
      %s274 = sphi 0, %s258
      %s282 = sphi 0, %s284
      %s285 = sphi 0, %s282
      %s286 = sphi 0, %s285
      %s302 = sphi 0, %s286
    $region4: #{critic_forward.1} parent=1 // loop_header_branch
      %27 = sbr.rel (%p25) target = $region8
    $region5: #{critic_forward.1} parent=1 // loop_body
      %s29 = ssub.s32 %s24, 1
      %s30 = ssub.s32 %s24, 2
      %s37 = sadd.s32 1, %s32
      %p38 = scmp.ge.s32.totalorder %s37, 1
      %s39 = scalar_select %p38, 0, %s37
      %s40 = sadd.s32 1, %s31
      %s41 = scalar_select %p38, %s40, %s31
      %p42 = scmp.ge.s32.totalorder %s41, 2
      %s43 = scalar_select %p42, 0, %s41
      %s44 = ssub.s32 %s32, %s39
      %p45 = scmp.eq.s32.totalorder %s44, 0
      %s47 = sadd.s32 %s46, 1
      %s48 = scalar_select %p45, %s46, %s47
      %p51 = pneg %p45
      %p52 = scmp.eq.s32.totalorder %s24, 1
      %p53 = por %p51, %p52
      %p54 = scmp.ne.s32.totalorder %s46, %s49
      %p55 = scmp.eq.s32.totalorder %s24, 0
      %p56 = por %p54, %p55
      %p57 = scmp.ne.s32.totalorder %s46, %s49
      %p58 = scmp.eq.s32.totalorder %s29, 1
      %p59 = por %p57, %p58
      %p60 = scmp.ne.s32.totalorder %s49, %s50
      %p61 = scmp.eq.s32.totalorder %s29, 0
      %p62 = por %p60, %p61
      %p63 = scmp.ne.s32.totalorder %s49, %s50
      %p64 = scmp.eq.s32.totalorder %s30, 1
      %p65 = por %p63, %p64
      %p67 = scmp.ne.s32.totalorder %s50, %s66
      %p68 = scmp.eq.s32.totalorder %s30, 0
      %p69 = por %p67, %p68
      %s70 = ssub.s32 %s32, %s39
      %p71 = scmp.eq.s32.totalorder %s70, 0
      %s73 = sadd.s32 %s72, 1
      %s74 = scalar_select %p71, %s72, %s73
      %p77 = pneg %p71
      %p78 = scmp.eq.s32.totalorder %s24, 1
      %p79 = por %p77, %p78
      %p80 = scmp.ne.s32.totalorder %s72, %s75
      %p81 = scmp.eq.s32.totalorder %s24, 0
      %p82 = por %p80, %p81
      %p83 = scmp.ne.s32.totalorder %s72, %s75
      %p84 = scmp.eq.s32.totalorder %s29, 1
      %p85 = por %p83, %p84
      %p86 = scmp.ne.s32.totalorder %s75, %s76
      %p87 = scmp.eq.s32.totalorder %s29, 0
      %p88 = por %p86, %p87
      %p89 = scmp.ne.s32.totalorder %s75, %s76
      %p90 = scmp.eq.s32.totalorder %s30, 1
      %p91 = por %p89, %p90
      %p93 = scmp.ne.s32.totalorder %s76, %s92
      %p94 = scmp.eq.s32.totalorder %s30, 0
      %p95 = por %p93, %p94
      %s96 = ssub.s32 %s31, %s43
      %p97 = scmp.eq.s32.totalorder %s96, 0
      %s99 = sadd.s32 %s98, 1
      %s100 = scalar_select %p97, %s98, %s99
      %p103 = pneg %p97
      %p104 = scmp.eq.s32.totalorder %s24, 1
      %p105 = por %p103, %p104
      %p106 = scmp.ne.s32.totalorder %s98, %s101
      %p107 = scmp.eq.s32.totalorder %s24, 0
      %p108 = por %p106, %p107
      %p109 = scmp.ne.s32.totalorder %s98, %s101
      %p110 = scmp.eq.s32.totalorder %s29, 1
      %p111 = por %p109, %p110
      %p112 = scmp.ne.s32.totalorder %s101, %s102
      %p113 = scmp.eq.s32.totalorder %s29, 0
      %p114 = por %p112, %p113
      %p115 = scmp.ne.s32.totalorder %s101, %s102
      %p116 = scmp.eq.s32.totalorder %s30, 1
      %p117 = por %p115, %p116
      %p119 = scmp.ne.s32.totalorder %s102, %s118
      %p120 = scmp.eq.s32.totalorder %s30, 0
      %p121 = por %p119, %p120
      %s122 = ssub.s32 %s31, %s43
      %p123 = scmp.eq.s32.totalorder %s122, 0
      %s125 = sadd.s32 %s124, 1
      %s126 = scalar_select %p123, %s124, %s125
      %p129 = pneg %p123
      %p130 = scmp.eq.s32.totalorder %s24, 1
      %p131 = por %p129, %p130
      %p132 = scmp.ne.s32.totalorder %s124, %s127
      %p133 = scmp.eq.s32.totalorder %s24, 0
      %p134 = por %p132, %p133
      %p135 = scmp.ne.s32.totalorder %s124, %s127
      %p136 = scmp.eq.s32.totalorder %s29, 1
      %p137 = por %p135, %p136
      %p138 = scmp.ne.s32.totalorder %s127, %s128
      %p139 = scmp.eq.s32.totalorder %s29, 0
      %p140 = por %p138, %p139
      %p141 = scmp.ne.s32.totalorder %s127, %s128
      %p142 = scmp.eq.s32.totalorder %s30, 1
      %p143 = por %p141, %p142
      %p145 = scmp.ne.s32.totalorder %s128, %s144
      %p146 = scmp.eq.s32.totalorder %s30, 0
      %p147 = por %p145, %p146
      %s148 = ssub.s32 %s31, %s43
      %p149 = scmp.eq.s32.totalorder %s148, 0
      %s151 = sadd.s32 %s150, 1
      %s152 = scalar_select %p149, %s150, %s151
      %p155 = pneg %p149
      %p156 = scmp.eq.s32.totalorder %s24, 1
      %p157 = por %p155, %p156
      %p158 = scmp.ne.s32.totalorder %s150, %s153
      %p159 = scmp.eq.s32.totalorder %s24, 0
      %p160 = por %p158, %p159
      %p161 = scmp.ne.s32.totalorder %s150, %s153
      %p162 = scmp.eq.s32.totalorder %s29, 1
      %p163 = por %p161, %p162
      %p164 = scmp.ne.s32.totalorder %s153, %s154
      %p165 = scmp.eq.s32.totalorder %s29, 0
      %p166 = por %p164, %p165
      %p167 = scmp.ne.s32.totalorder %s153, %s154
      %p168 = scmp.eq.s32.totalorder %s30, 1
      %p169 = por %p167, %p168
      %p171 = scmp.ne.s32.totalorder %s154, %s170
      %p172 = scmp.eq.s32.totalorder %s30, 0
      %p173 = por %p171, %p172
      %s174 = ssub.s32 %s31, %s43
      %p175 = scmp.eq.s32.totalorder %s174, 0
      %s177 = sadd.s32 %s176, 1
      %s178 = scalar_select %p175, %s176, %s177
      %p181 = pneg %p175
      %p182 = scmp.eq.s32.totalorder %s24, 1
      %p183 = por %p181, %p182
      %p184 = scmp.ne.s32.totalorder %s176, %s179
      %p185 = scmp.eq.s32.totalorder %s24, 0
      %p186 = por %p184, %p185
      %p187 = scmp.ne.s32.totalorder %s176, %s179
      %p188 = scmp.eq.s32.totalorder %s29, 1
      %p189 = por %p187, %p188
      %p190 = scmp.ne.s32.totalorder %s179, %s180
      %p191 = scmp.eq.s32.totalorder %s29, 0
      %p192 = por %p190, %p191
      %p193 = scmp.ne.s32.totalorder %s179, %s180
      %p194 = scmp.eq.s32.totalorder %s30, 1
      %p195 = por %p193, %p194
      %p197 = scmp.ne.s32.totalorder %s180, %s196
      %p198 = scmp.eq.s32.totalorder %s30, 0
      %p199 = por %p197, %p198
      %s200 = ssub.s32 %s31, %s43
      %p201 = scmp.eq.s32.totalorder %s200, 0
      %s203 = sadd.s32 %s202, 1
      %s204 = scalar_select %p201, %s202, %s203
      %p207 = pneg %p201
      %p208 = scmp.eq.s32.totalorder %s24, 1
      %p209 = por %p207, %p208
      %p210 = scmp.ne.s32.totalorder %s202, %s205
      %p211 = scmp.eq.s32.totalorder %s24, 0
      %p212 = por %p210, %p211
      %p213 = scmp.ne.s32.totalorder %s202, %s205
      %p214 = scmp.eq.s32.totalorder %s29, 1
      %p215 = por %p213, %p214
      %p216 = scmp.ne.s32.totalorder %s205, %s206
      %p217 = scmp.eq.s32.totalorder %s29, 0
      %p218 = por %p216, %p217
      %p219 = scmp.ne.s32.totalorder %s205, %s206
      %p220 = scmp.eq.s32.totalorder %s30, 1
      %p221 = por %p219, %p220
      %p223 = scmp.ne.s32.totalorder %s206, %s222
      %p224 = scmp.eq.s32.totalorder %s30, 0
      %p225 = por %p223, %p224
      %s226 = ssub.s32 %s31, %s43
      %p227 = scmp.eq.s32.totalorder %s226, 0
      %s229 = sadd.s32 %s228, 1
      %s230 = scalar_select %p227, %s228, %s229
      %p233 = pneg %p227
      %p234 = scmp.eq.s32.totalorder %s24, 1
      %p235 = por %p233, %p234
      %p236 = scmp.ne.s32.totalorder %s228, %s231
      %p237 = scmp.eq.s32.totalorder %s24, 0
      %p238 = por %p236, %p237
      %p239 = scmp.ne.s32.totalorder %s228, %s231
      %p240 = scmp.eq.s32.totalorder %s29, 1
      %p241 = por %p239, %p240
      %p242 = scmp.ne.s32.totalorder %s231, %s232
      %p243 = scmp.eq.s32.totalorder %s29, 0
      %p244 = por %p242, %p243
      %p245 = scmp.ne.s32.totalorder %s231, %s232
      %p246 = scmp.eq.s32.totalorder %s30, 1
      %p247 = por %p245, %p246
      %p249 = scmp.ne.s32.totalorder %s232, %s248
      %p250 = scmp.eq.s32.totalorder %s30, 0
      %p251 = por %p249, %p250
      %s252 = ssub.s32 %s31, %s43
      %p253 = scmp.eq.s32.totalorder %s252, 0
      %s255 = sadd.s32 %s254, 1
      %s256 = scalar_select %p253, %s254, %s255
      %p259 = pneg %p253
      %p260 = scmp.eq.s32.totalorder %s24, 1
      %p261 = por %p259, %p260
      %p262 = scmp.ne.s32.totalorder %s254, %s257
      %p263 = scmp.eq.s32.totalorder %s24, 0
      %p264 = por %p262, %p263
      %p265 = scmp.ne.s32.totalorder %s254, %s257
      %p266 = scmp.eq.s32.totalorder %s29, 1
      %p267 = por %p265, %p266
      %p268 = scmp.ne.s32.totalorder %s257, %s258
      %p269 = scmp.eq.s32.totalorder %s29, 0
      %p270 = por %p268, %p269
      %p271 = scmp.ne.s32.totalorder %s257, %s258
      %p272 = scmp.eq.s32.totalorder %s30, 1
      %p273 = por %p271, %p272
      %p275 = scmp.ne.s32.totalorder %s258, %s274
      %p276 = scmp.eq.s32.totalorder %s30, 0
      %p277 = por %p275, %p276
      %s278 = ssub.s32 %s31, %s43
      %s279 = ssub.s32 %s32, %s39
      %s280 = sor.u32 %s278, %s279
      %p281 = scmp.eq.s32.totalorder %s280, 0
      %s283 = sadd.s32 %s282, 1
      %s284 = scalar_select %p281, %s282, %s283
      %p287 = pneg %p281
      %p288 = scmp.eq.s32.totalorder %s24, 1
      %p289 = por %p287, %p288
      %p290 = scmp.ne.s32.totalorder %s282, %s285
      %p291 = scmp.eq.s32.totalorder %s24, 0
      %p292 = por %p290, %p291
      %p293 = scmp.ne.s32.totalorder %s282, %s285
      %p294 = scmp.eq.s32.totalorder %s29, 1
      %p295 = por %p293, %p294
      %p296 = scmp.ne.s32.totalorder %s285, %s286
      %p297 = scmp.eq.s32.totalorder %s29, 0
      %p298 = por %p296, %p297
      %p299 = scmp.ne.s32.totalorder %s285, %s286
      %p300 = scmp.eq.s32.totalorder %s30, 1
      %p301 = por %p299, %p300
      %p303 = scmp.ne.s32.totalorder %s286, %s302
      %p304 = scmp.eq.s32.totalorder %s30, 0
      %p305 = por %p303, %p304
      %p306 = scmp.le.s32.totalorder 1, %s24
      %p307 = scmp.lt.s32.totalorder %s24, 3
      %p308 = pnand %p306, %p307
      %p309 = pneg %p308
      // Predicated region
      $region9: #{critic_forward.1} parent=5 // pred_check
        _
      $region10: #{critic_forward.1} parent=5 // pred_check_branch
        %311 = sbr.rel (%p308) target = $region12
      $region11: #{critic_forward.1} parent=5 // pred_region
        %s312 = ssub.s32 %s24, 1
        // Predicated region
        $region13: #{critic_forward.1} parent=11 // pred_check
          %p313 = pneg %p62
        $region14: #{critic_forward.1} parent=11 // pred_check_branch
          %315 = sbr.rel (%p313) target = $region16
        $region15: #{critic_forward.1} parent=11 // pred_region
          %p316 = scmp.lt.s32.totalorder %s34, 0
          %s317 = scalar_select %p316, %s34, 0
          %s318 = smul.addr %s317, 8
          %s319 = scalar_lea.vmem %s0, %s318
        $region16: #{critic_forward.1} parent=11 // pred_fallthru
          _
        // Predicated region
        $region17: #{critic_forward.1} parent=11 // pred_check
          %p320 = pneg %p88
        $region18: #{critic_forward.1} parent=11 // pred_check_branch
          %322 = sbr.rel (%p320) target = $region20
        $region19: #{critic_forward.1} parent=11 // pred_region
          %p323 = scmp.lt.s32.totalorder %s34, 0
          %s324 = scalar_select %p323, %s34, 0
          %s325 = smul.addr %s324, 8
          %s326 = scalar_lea.vmem %s1, %s325
        $region20: #{critic_forward.1} parent=11 // pred_fallthru
          _
      $region12: #{critic_forward.1} parent=5 // pred_fallthru
        _
      %p327 = scmp.lt.s32.totalorder %s24, 2
      // Predicated region
      $region21: #{critic_forward.1} parent=5 // pred_check
        %p328 = pneg %p327
      $region22: #{critic_forward.1} parent=5 // pred_check_branch
        %330 = sbr.rel (%p328) target = $region24
      $region23: #{critic_forward.1} parent=5 // pred_region
        // Predicated region
        $region25: #{critic_forward.1} parent=23 // pred_check
          %p331 = pneg %p108
        $region26: #{critic_forward.1} parent=23 // pred_check_branch
          %333 = sbr.rel (%p331) target = $region28
        $region27: #{critic_forward.1} parent=23 // pred_region
          %s334 = sand.u32 %s98, 1
          %s335 = scalar_lea.sflag [#allocation3], %s334
          %s336 = sand.u32 %s98, 1
          %s337 = smul.addr %s336, 8
          %s338 = scalar_lea.vmem [#allocation2], %s337
          %s340 = ssub.s32 128, 128
          %341 = vsyncadd %s335, %s340
          %s342 = smul.addr %s31, 2
          %s343 = smul.addr %s342, 64
          %s344 = scalar_lea.hbm %s2, %s343
          %s345 = sshll.u32 %s338, 4
          %s346 = int_to_ptr.vmem [resolvable:$true] %s345
          %351 = dma.hbm_to_vmem [thread:$0]  %s344, 128, %s346, %s335, 64, 64, 4
        $region28: #{critic_forward.1} parent=23 // pred_fallthru
          _
        // Predicated region
        $region29: #{critic_forward.1} parent=23 // pred_check
          %p352 = pneg %p134
        $region30: #{critic_forward.1} parent=23 // pred_check_branch
          %354 = sbr.rel (%p352) target = $region32
        $region31: #{critic_forward.1} parent=23 // pred_region
          %s355 = sand.u32 %s24, 1
          %s356 = scalar_lea.sflag [#allocation5], %s355
          %s357 = sand.u32 %s124, 1
          %s358 = smul.addr %s357, 4
          %s359 = scalar_lea.vmem [#allocation4], %s358
          %s361 = ssub.s32 64, 64
          %362 = vsyncadd %s356, %s361
          %s363 = smul.addr %s31, 64
          %s364 = scalar_lea.hbm %s3, %s363
          %s366 = sshll.u32 %s359, 4
          %s367 = int_to_ptr.vmem [resolvable:$true] %s366
          %369 = dma.hbm_to_vmem [thread:$0]  %s364, 64, %s367, %s356
        $region32: #{critic_forward.1} parent=23 // pred_fallthru
          _
        // Predicated region
        $region33: #{critic_forward.1} parent=23 // pred_check
          %p370 = pneg %p160
        $region34: #{critic_forward.1} parent=23 // pred_check_branch
          %372 = sbr.rel (%p370) target = $region36
        $region35: #{critic_forward.1} parent=23 // pred_region
          %p373 = scmp.lt.s32.totalorder %s31, 1
          %s374 = scalar_select %p373, %s31, 1
          %s375 = scalar_lea.vmem %s4, %s374
        $region36: #{critic_forward.1} parent=23 // pred_fallthru
          _
        // Predicated region
        $region37: #{critic_forward.1} parent=23 // pred_check
          %p376 = pneg %p186
        $region38: #{critic_forward.1} parent=23 // pred_check_branch
          %378 = sbr.rel (%p376) target = $region40
        $region39: #{critic_forward.1} parent=23 // pred_region
          %s379 = sand.u32 %s24, 1
          %s380 = scalar_lea.sflag [#allocation5], %s379
          %s381 = sand.u32 %s176, 1
          %s382 = smul.addr %s381, 16
          %s383 = scalar_lea.vmem [#allocation6], %s382
          %s385 = ssub.s32 256, 256
          %386 = vsyncadd %s380, %s385
          %s387 = smul.addr %s31, 4
          %s388 = smul.addr %s387, 64
          %s389 = scalar_lea.hbm %s5, %s388
          %s390 = sshll.u32 %s383, 4
          %s391 = int_to_ptr.vmem [resolvable:$true] %s390
          %396 = dma.hbm_to_vmem [thread:$0]  %s389, 256, %s391, %s380, 64, 64, 4
        $region40: #{critic_forward.1} parent=23 // pred_fallthru
          _
        // Predicated region
        $region41: #{critic_forward.1} parent=23 // pred_check
          %p397 = pneg %p212
        $region42: #{critic_forward.1} parent=23 // pred_check_branch
          %399 = sbr.rel (%p397) target = $region44
        $region43: #{critic_forward.1} parent=23 // pred_region
          %s400 = sand.u32 %s202, 1
          %s401 = scalar_lea.sflag [#allocation8], %s400
          %s402 = sand.u32 %s202, 1
          %s403 = scalar_lea.vmem [#allocation7], %s402
          %s405 = ssub.s32 16, 16
          %406 = vsyncadd %s401, %s405
          %s407 = smul.addr %s31, 16
          %s408 = scalar_lea.hbm %s6, %s407
          %s410 = sshll.u32 %s403, 4
          %s411 = int_to_ptr.vmem [resolvable:$true] %s410
          %413 = dma.hbm_to_vmem [thread:$0]  %s408, 16, %s411, %s401
        $region44: #{critic_forward.1} parent=23 // pred_fallthru
          _
        // Predicated region
        $region45: #{critic_forward.1} parent=23 // pred_check
          %p414 = pneg %p238
        $region46: #{critic_forward.1} parent=23 // pred_check_branch
          %416 = sbr.rel (%p414) target = $region48
        $region47: #{critic_forward.1} parent=23 // pred_region
          %p417 = scmp.lt.s32.totalorder %s31, 1
          %s418 = scalar_select %p417, %s31, 1
          %s419 = smul.addr %s418, 4
          %s420 = smul.addr %s419, 4
          %s421 = scalar_lea.vmem %s7, %s420
        $region48: #{critic_forward.1} parent=23 // pred_fallthru
          _
        // Predicated region
        $region49: #{critic_forward.1} parent=23 // pred_check
          %p422 = pneg %p264
        $region50: #{critic_forward.1} parent=23 // pred_check_branch
          %424 = sbr.rel (%p422) target = $region52
        $region51: #{critic_forward.1} parent=23 // pred_region
          %p425 = scmp.lt.s32.totalorder %s31, 1
          %s426 = scalar_select %p425, %s31, 1
          %s427 = scalar_lea.vmem %s8, %s426
        $region52: #{critic_forward.1} parent=23 // pred_fallthru
          _
      $region24: #{critic_forward.1} parent=5 // pred_fallthru
        _
      %p428 = scmp.le.s32.totalorder 1, %s24
      %p429 = scmp.lt.s32.totalorder %s24, 3
      %p430 = pnand %p428, %p429
      %p431 = pneg %p430
      // Predicated region
      $region53: #{critic_forward.1} parent=5 // pred_check
        _
      $region54: #{critic_forward.1} parent=5 // pred_check_branch
        %433 = sbr.rel (%p430) target = $region56
      $region55: #{critic_forward.1} parent=5 // pred_region
        %s434 = ssub.s32 %s24, 1
        %s435 = sand.u32 %s101, 1
        %s436 = scalar_lea.sflag [#allocation3], %s435
        %s437 = sand.u32 %s101, 1
        %s438 = smul.addr %s437, 8
        %s439 = scalar_lea.vmem [#allocation2], %s438
        // Predicated region
        $region57: #{critic_forward.1} parent=55 // pred_check
          %p440 = pneg %p114
        $region58: #{critic_forward.1} parent=55 // pred_check_branch
          %442 = sbr.rel (%p440) target = $region60
        $region59: #{critic_forward.1} parent=55 // pred_region
          %443 = dma.done %s436, 128
        $region60: #{critic_forward.1} parent=55 // pred_fallthru
          _
        %s444 = sand.u32 %s29, 1
        %s445 = scalar_lea.sflag [#allocation5], %s444
        %s446 = sand.u32 %s127, 1
        %s447 = smul.addr %s446, 4
        %s448 = scalar_lea.vmem [#allocation4], %s447
        // Predicated region
        $region61: #{critic_forward.1} parent=55 // pred_check
          %p449 = pneg %p140
        $region62: #{critic_forward.1} parent=55 // pred_check_branch
          %451 = sbr.rel (%p449) target = $region64
        $region63: #{critic_forward.1} parent=55 // pred_region
          %452 = dma.done %s445, 64
        $region64: #{critic_forward.1} parent=55 // pred_fallthru
          _
        %s453 = sand.u32 %s29, 1
        %s454 = scalar_lea.sflag [#allocation5], %s453
        %s455 = sand.u32 %s179, 1
        %s456 = smul.addr %s455, 16
        %s457 = scalar_lea.vmem [#allocation6], %s456
        // Predicated region
        $region65: #{critic_forward.1} parent=55 // pred_check
          %p458 = pneg %p192
        $region66: #{critic_forward.1} parent=55 // pred_check_branch
          %460 = sbr.rel (%p458) target = $region68
        $region67: #{critic_forward.1} parent=55 // pred_region
          %461 = dma.done %s454, 256
        $region68: #{critic_forward.1} parent=55 // pred_fallthru
          _
        %s462 = sand.u32 %s205, 1
        %s463 = scalar_lea.sflag [#allocation8], %s462
        %s464 = sand.u32 %s205, 1
        %s465 = scalar_lea.vmem [#allocation7], %s464
        // Predicated region
        $region69: #{critic_forward.1} parent=55 // pred_check
          %p466 = pneg %p218
        $region70: #{critic_forward.1} parent=55 // pred_check_branch
          %468 = sbr.rel (%p466) target = $region72
        $region71: #{critic_forward.1} parent=55 // pred_region
          %469 = dma.done %s463, 16
        $region72: #{critic_forward.1} parent=55 // pred_fallthru
          _
        %p470 = scmp.lt.s32.totalorder %s34, 0
        %s471 = scalar_select %p470, %s34, 0
        %s472 = smul.addr %s471, 8
        %s473 = scalar_lea.vmem %s0, %s472
        %p474 = pneg %p62
        %p475 = pneg %p59
        %p476 = scmp.lt.s32.totalorder %s34, 0
        %s477 = scalar_select %p476, %s34, 0
        %s478 = smul.addr %s477, 8
        %s479 = scalar_lea.vmem %s1, %s478
        %p480 = pneg %p88
        %p481 = pneg %p85
        %s482 = sand.u32 %s101, 1
        %s483 = scalar_lea.sflag [#allocation3], %s482
        %s484 = sand.u32 %s101, 1
        %s485 = smul.addr %s484, 8
        %s486 = scalar_lea.vmem [#allocation2], %s485
        %p487 = pneg %p114
        %p488 = pneg %p111
        %s489 = sand.u32 %s29, 1
        %s490 = scalar_lea.sflag [#allocation5], %s489
        %s491 = sand.u32 %s127, 1
        %s492 = smul.addr %s491, 4
        %s493 = scalar_lea.vmem [#allocation4], %s492
        %p494 = pneg %p140
        %p495 = pneg %p137
        %p496 = scmp.lt.s32.totalorder %s33, 1
        %s497 = scalar_select %p496, %s33, 1
        %s498 = scalar_lea.vmem %s4, %s497
        %p499 = pneg %p166
        %p500 = pneg %p163
        %s501 = sand.u32 %s29, 1
        %s502 = scalar_lea.sflag [#allocation5], %s501
        %s503 = sand.u32 %s179, 1
        %s504 = smul.addr %s503, 16
        %s505 = scalar_lea.vmem [#allocation6], %s504
        %p506 = pneg %p192
        %p507 = pneg %p189
        %s508 = sand.u32 %s205, 1
        %s509 = scalar_lea.sflag [#allocation8], %s508
        %s510 = sand.u32 %s205, 1
        %s511 = scalar_lea.vmem [#allocation7], %s510
        %p512 = pneg %p218
        %p513 = pneg %p215
        %p514 = scmp.lt.s32.totalorder %s33, 1
        %s515 = scalar_select %p514, %s33, 1
        %s516 = smul.addr %s515, 4
        %s517 = smul.addr %s516, 4
        %s518 = scalar_lea.vmem %s7, %s517
        %p519 = pneg %p244
        %p520 = pneg %p241
        %p521 = scmp.lt.s32.totalorder %s33, 1
        %s522 = scalar_select %p521, %s33, 1
        %s523 = scalar_lea.vmem %s8, %s522
        %p524 = pneg %p270
        %p525 = pneg %p267
        %p526 = pneg %p298
        %p527 = pneg %p295
        %p528 = scmp.lt.s32.totalorder %s33, 1
        %s529 = scalar_select %p528, %s33, 1
        %p530 = scmp.lt.s32.totalorder %s34, 0
        %s531 = scalar_select %p530, %s34, 0
        %s532 = sadd.s32 %s531, %s529
        %s533 = smul.addr %s532, 8
        %s534 = scalar_lea.vmem %s9, %s533
        %p535 = scmp.lt.s32.totalorder %s34, 0
        %s536 = scalar_select %p535, %s34, 0
        %s537 = smul.addr %s536, 8
        %s538 = scalar_lea.vmem %s0, %s537
        %p539 = scmp.lt.s32.totalorder %s34, 0
        %s540 = scalar_select %p539, %s34, 0
        %s541 = smul.addr %s540, 8
        %s542 = scalar_lea.vmem %s1, %s541
        %p543 = scmp.lt.s32.totalorder %s33, 1
        %s544 = scalar_select %p543, %s33, 1
        %s545 = scalar_lea.vmem %s4, %s544
        %p546 = scmp.lt.s32.totalorder %s33, 1
        %s547 = scalar_select %p546, %s33, 1
        %s548 = smul.addr %s547, 4
        %s549 = smul.addr %s548, 4
        %s550 = scalar_lea.vmem %s7, %s549
        %p551 = scmp.lt.s32.totalorder %s33, 1
        %s552 = scalar_select %p551, %s33, 1
        %s553 = scalar_lea.vmem %s8, %s552
        %p554 = scmp.lt.s32.totalorder %s33, 1
        %s555 = scalar_select %p554, %s33, 1
        %p556 = scmp.lt.s32.totalorder %s34, 0
        %s557 = scalar_select %p556, %s34, 0
        %s558 = sadd.s32 %s557, %s555
        %s559 = smul.addr %s558, 8
        %s560 = scalar_lea.vmem %s9, %s559
        %v562 = vld [vmem:[%s538] sm:$0xff]
        %v563 = vpack.c.bf16 %v562, %v562
        %v564 = vld [vmem:[%s542] sm:$0xff]
        %v565 = vpack.c.bf16 %v564, %v564
        %v566 = vld [vmem:[%s439] sm:$0xf]
        %v567 = vld [vmem:[%s439 + $0x4] sm:$0xf]
        %v568 = vld [vmem:[%s448] sm:$0xf]
        %vm569 = vcmask 64512
        %v571 = vsel %vm569, %v565, 0
        %vm573 = vcmask 1043456
        %v575 = vsel %vm573, %v568, 0
        %577 = vmatprep.subr.bf16.mxu0 0
        %578 = vmatpush1.bf16.msra.mxu0 0
        %579 = vmatprep.subr.bf16.mxu0 0
        %580 = vmatpush1.bf16.msra.mxu0 0
        %581 = vmatprep.subr.bf16.mxu0 0
        %582 = vmatpush1.bf16.msra.mxu0 0
        %583 = vmatprep.subr.bf16.mxu0 0
        %584 = vmatpush1.bf16.msra.mxu0 0
        %585 = vmatprep.subr.bf16.mxu0 0
        %586 = vmatpush1.bf16.msra.mxu0 0
        %587 = vmatprep.subr.bf16.mxu0 0
        %588 = vmatpush1.bf16.msra.mxu0 0
        %589 = vmatprep.subr.bf16.mxu0 0
        %590 = vmatpush1.bf16.msra.mxu0 0
        %591 = vmatprep.subr.bf16.mxu0 0
        %592 = vmatpush1.bf16.msra.mxu0 %v575
        %593 = vmatprep.subr.bf16.mxu0 0
        %594 = vmatpush2.bf16.msra.mxu0 0
        %595 = vmatprep.subr.bf16.mxu0 0
        %596 = vmatpush2.bf16.msra.mxu0 0
        %597 = vmatprep.subr.bf16.mxu0 0
        %598 = vmatpush2.bf16.msra.mxu0 0
        %599 = vmatprep.subr.bf16.mxu0 0
        %600 = vmatpush2.bf16.msra.mxu0 0
        %601 = vmatprep.subr.bf16.mxu0 0
        %602 = vmatpush2.bf16.msra.mxu0 0
        %603 = vmatprep.subr.bf16.mxu0 0
        %604 = vmatpush2.bf16.msra.mxu0 0
        %605 = vmatprep.subr.bf16.mxu0 0
        %606 = vmatpush2.bf16.msra.mxu0 0
        %607 = vmatprep.subr.bf16.mxu0 0
        %608 = vmatpush2.bf16.msra.mxu0 0
        %609 = vmatprep.mubr.bf16.mxu0 0
        %610 = vmatmul.mubr.bf16.gmra.mxu0 %v571
        %v611 = vpop.f32.mrf.mxu0
        %v612 = vadd.f32 0.0, %v611
        %v613 = vpop.f32.mrf.mxu0
        %v614 = vpop.f32.mrf.mxu0
        %v615 = vpop.f32.mrf.mxu0
        %616 = vdwg.mxu0
        %v619 = vunpack.c.l.b16 %v566
        %v620 = vunpack.c.l.b16 %v567
        %v621 = vpack.c.b16 %v620, %v619
        %vm623 = vcmask 130048
        %v625 = vsel %vm623, %v563, 0
        %627 = vmatprep.subr.bf16.mxu0 0
        %628 = vmatpush1.bf16.msra.mxu0 0
        %629 = vmatprep.subr.bf16.mxu0 0
        %630 = vmatpush1.bf16.msra.mxu0 0
        %631 = vmatprep.subr.bf16.mxu0 0
        %632 = vmatpush1.bf16.msra.mxu0 0
        %633 = vmatprep.subr.bf16.mxu0 0
        %634 = vmatpush1.bf16.msra.mxu0 0
        %635 = vmatprep.subr.bf16.mxu0 0
        %636 = vmatpush1.bf16.msra.mxu0 0
        %637 = vmatprep.subr.bf16.mxu0 0
        %638 = vmatpush1.bf16.msra.mxu0 0
        %639 = vmatprep.subr.bf16.mxu0 0
        %640 = vmatpush1.bf16.msra.mxu0 0
        %641 = vmatprep.subr.bf16.mxu0 0
        %642 = vmatpush1.bf16.msra.mxu0 %v621
        %643 = vmatprep.subr.bf16.mxu0 0
        %644 = vmatpush2.bf16.msra.mxu0 0
        %645 = vmatprep.subr.bf16.mxu0 0
        %646 = vmatpush2.bf16.msra.mxu0 0
        %647 = vmatprep.subr.bf16.mxu0 0
        %648 = vmatpush2.bf16.msra.mxu0 0
        %649 = vmatprep.subr.bf16.mxu0 0
        %650 = vmatpush2.bf16.msra.mxu0 0
        %651 = vmatprep.subr.bf16.mxu0 0
        %652 = vmatpush2.bf16.msra.mxu0 0
        %653 = vmatprep.subr.bf16.mxu0 0
        %654 = vmatpush2.bf16.msra.mxu0 0
        %655 = vmatprep.subr.bf16.mxu0 0
        %656 = vmatpush2.bf16.msra.mxu0 0
        %657 = vmatprep.subr.bf16.mxu0 0
        %658 = vmatpush2.bf16.msra.mxu0 0
        %659 = vmatprep.mubr.bf16.mxu0 0
        %660 = vmatmul.mubr.bf16.gmra.mxu0 %v625
        %v661 = vpop.f32.mrf.mxu0
        %v662 = vadd.f32 %v612, %v661
        %v663 = vpop.f32.mrf.mxu0
        %v664 = vpop.f32.mrf.mxu0
        %v665 = vpop.f32.mrf.mxu0
        %666 = vdwg.mxu0
        %v667 = vld [vmem:[%s545] sm:$0x1]
        %v669 = vlaneseq
        %v670 = vshrl.u32 %v669, 7
        %v671 = vsub.s32 0, %v670
        %v672 = vrot.slane %v667, %v671
        %v674 = vadd.f32 %v662, %v672
        %v675 = vmax.f32 %v674, 0.0
        %v676 = vpack.c.bf16 %v675, %v675
        %v677 = vld [vmem:[%s457] sm:$0xf]
        %v678 = vld [vmem:[%s457 + $0x4] sm:$0xf]
        %v679 = vld [vmem:[%s457 + $0x8] sm:$0xf]
        %v680 = vld [vmem:[%s457 + $0xc] sm:$0xf]
        %v681 = vld [vmem:[%s465] sm:$0x1]
        %v683 = vlaneseq
        %v684 = vshrl.u32 %v683, 7
        %v685 = vsub.s32 0, %v684
        %v686 = vrot.slane %v681, %v685
        %v692 = vunpack.c.l.b16 %v677
        %v693 = vunpack.c.l.b16 %v678
        %v694 = vunpack.c.l.b16 %v679
        %v695 = vunpack.c.l.b16 %v680
        %v696 = vpack.c.b16 %v693, %v692
        %v697 = vpack.c.b16 %v695, %v694
        %vm700 = vcmask 261120
        %v702 = vsel %vm700, %v676, 0
        %704 = vmatprep.subr.bf16.mxu0 0
        %705 = vmatpush1.bf16.msra.mxu0 0
        %706 = vmatprep.subr.bf16.mxu0 0
        %707 = vmatpush1.bf16.msra.mxu0 0
        %708 = vmatprep.subr.bf16.mxu0 0
        %709 = vmatpush1.bf16.msra.mxu0 0
        %710 = vmatprep.subr.bf16.mxu0 0
        %711 = vmatpush1.bf16.msra.mxu0 0
        %712 = vmatprep.subr.bf16.mxu0 0
        %713 = vmatpush1.bf16.msra.mxu0 0
        %714 = vmatprep.subr.bf16.mxu0 0
        %715 = vmatpush1.bf16.msra.mxu0 0
        %716 = vmatprep.subr.bf16.mxu0 0
        %717 = vmatpush1.bf16.msra.mxu0 %v697
        %718 = vmatprep.subr.bf16.mxu0 0
        %719 = vmatpush1.bf16.msra.mxu0 %v696
        %720 = vmatprep.subr.bf16.mxu0 0
        %721 = vmatpush2.bf16.msra.mxu0 0
        %722 = vmatprep.subr.bf16.mxu0 0
        %723 = vmatpush2.bf16.msra.mxu0 0
        %724 = vmatprep.subr.bf16.mxu0 0
        %725 = vmatpush2.bf16.msra.mxu0 0
        %726 = vmatprep.subr.bf16.mxu0 0
        %727 = vmatpush2.bf16.msra.mxu0 0
        %728 = vmatprep.subr.bf16.mxu0 0
        %729 = vmatpush2.bf16.msra.mxu0 0
        %730 = vmatprep.subr.bf16.mxu0 0
        %731 = vmatpush2.bf16.msra.mxu0 0
        %732 = vmatprep.subr.bf16.mxu0 0
        %733 = vmatpush2.bf16.msra.mxu0 0
        %734 = vmatprep.subr.bf16.mxu0 0
        %735 = vmatpush2.bf16.msra.mxu0 0
        %736 = vmatprep.mubr.bf16.mxu0 0
        %737 = vmatmul.mubr.bf16.gmra.mxu0 %v702
        %v738 = vpop.f32.mrf.mxu0
        %v739 = vadd.f32 %v686, %v738
        %v740 = vpop.f32.mrf.mxu0
        %v741 = vpop.f32.mrf.mxu0
        %v742 = vpop.f32.mrf.mxu0
        %743 = vdwg.mxu0
        %v744 = vmax.f32 %v739, 0.0
        %v745 = vpack.c.bf16 %v744, %v744
        %v746 = vld [vmem:[%s550] sm:$0xf]
        %v747 = vld [vmem:[%s550 + $0x4] sm:$0xf]
        %v748 = vld [vmem:[%s550 + $0x8] sm:$0xf]
        %v749 = vld [vmem:[%s550 + $0xc] sm:$0xf]
        %v750 = vld [vmem:[%s553] sm:$0x1]
        %v752 = vlaneseq
        %v753 = vshrl.u32 %v752, 7
        %v754 = vsub.s32 0, %v753
        %v755 = vrot.slane %v750, %v754
        %v761 = vunpack.c.l.b16 %v746
        %v762 = vunpack.c.l.b16 %v747
        %v763 = vunpack.c.l.b16 %v748
        %v764 = vunpack.c.l.b16 %v749
        %v765 = vpack.c.b16 %v762, %v761
        %v766 = vpack.c.b16 %v764, %v763
        %v770 = vsel %vm700, %v745, 0
        %772 = vmatprep.subr.bf16.mxu0 0
        %773 = vmatpush1.bf16.msra.mxu0 0
        %774 = vmatprep.subr.bf16.mxu0 0
        %775 = vmatpush1.bf16.msra.mxu0 0
        %776 = vmatprep.subr.bf16.mxu0 0
        %777 = vmatpush1.bf16.msra.mxu0 0
        %778 = vmatprep.subr.bf16.mxu0 0
        %779 = vmatpush1.bf16.msra.mxu0 0
        %780 = vmatprep.subr.bf16.mxu0 0
        %781 = vmatpush1.bf16.msra.mxu0 0
        %782 = vmatprep.subr.bf16.mxu0 0
        %783 = vmatpush1.bf16.msra.mxu0 0
        %784 = vmatprep.subr.bf16.mxu0 0
        %785 = vmatpush1.bf16.msra.mxu0 %v766
        %786 = vmatprep.subr.bf16.mxu0 0
        %787 = vmatpush1.bf16.msra.mxu0 %v765
        %788 = vmatprep.subr.bf16.mxu0 0
        %789 = vmatpush2.bf16.msra.mxu0 0
        %790 = vmatprep.subr.bf16.mxu0 0
        %791 = vmatpush2.bf16.msra.mxu0 0
        %792 = vmatprep.subr.bf16.mxu0 0
        %793 = vmatpush2.bf16.msra.mxu0 0
        %794 = vmatprep.subr.bf16.mxu0 0
        %795 = vmatpush2.bf16.msra.mxu0 0
        %796 = vmatprep.subr.bf16.mxu0 0
        %797 = vmatpush2.bf16.msra.mxu0 0
        %798 = vmatprep.subr.bf16.mxu0 0
        %799 = vmatpush2.bf16.msra.mxu0 0
        %800 = vmatprep.subr.bf16.mxu0 0
        %801 = vmatpush2.bf16.msra.mxu0 0
        %802 = vmatprep.subr.bf16.mxu0 0
        %803 = vmatpush2.bf16.msra.mxu0 0
        %804 = vmatprep.mubr.bf16.mxu0 0
        %805 = vmatmul.mubr.bf16.gmra.mxu0 %v770
        %v806 = vpop.f32.mrf.mxu0
        %v807 = vadd.f32 %v755, %v806
        %v808 = vpop.f32.mrf.mxu0
        %v809 = vpop.f32.mrf.mxu0
        %v810 = vpop.f32.mrf.mxu0
        %811 = vdwg.mxu0
        %812 = vst [vmem:[%s560] sm:$0xff] %v807
        %p813 = scmp.lt.s32.totalorder %s33, 1
        %s814 = scalar_select %p813, %s33, 1
        %p815 = scmp.lt.s32.totalorder %s34, 0
        %s816 = scalar_select %p815, %s34, 0
        %s817 = sadd.s32 %s816, %s814
        %s818 = smul.addr %s817, 8
        %s819 = scalar_lea.vmem %s9, %s818
        // Predicated region
        $region73: #{critic_forward.1} parent=55 // pred_check
          %p820 = pneg %p295
        $region74: #{critic_forward.1} parent=55 // pred_check_branch
          %822 = sbr.rel (%p820) target = $region76
        $region75: #{critic_forward.1} parent=55 // pred_region
          _
        $region76: #{critic_forward.1} parent=55 // pred_fallthru
          _
      $region56: #{critic_forward.1} parent=5 // pred_fallthru
        _
      %p823 = scmp.le.s32.totalorder 2, %s24
      // Predicated region
      $region77: #{critic_forward.1} parent=5 // pred_check
        %p824 = pneg %p823
      $region78: #{critic_forward.1} parent=5 // pred_check_branch
        %826 = sbr.rel (%p824) target = $region80
      $region79: #{critic_forward.1} parent=5 // pred_region
        %s827 = ssub.s32 %s24, 2
        // Predicated region
        $region81: #{critic_forward.1} parent=79 // pred_check
          %p828 = pneg %p301
        $region82: #{critic_forward.1} parent=79 // pred_check_branch
          %830 = sbr.rel (%p828) target = $region84
        $region83: #{critic_forward.1} parent=79 // pred_region
          %p831 = scmp.lt.s32.totalorder %s35, 1
          %s832 = scalar_select %p831, %s35, 1
          %p833 = scmp.lt.s32.totalorder %s36, 0
          %s834 = scalar_select %p833, %s36, 0
          %s835 = sadd.s32 %s834, %s832
          %s836 = smul.addr %s835, 8
          %s837 = scalar_lea.vmem %s9, %s836
        $region84: #{critic_forward.1} parent=79 // pred_fallthru
          _
      $region80: #{critic_forward.1} parent=5 // pred_fallthru
        _
    $region6: #{critic_forward.1} parent=1 // loop_footer
      %s28 = sadd.s32 1, %s24
    $region7: #{critic_forward.1} parent=1 // loop_footer_branch
      %23 = sbr.rel target = $region3
    $region8: #{critic_forward.1} parent=1 // loop_exit
      _
    %838 = vsyncpa [#allocation3], 1
    %s839 = scalar_lea.sflag [#allocation3], 1
    %840 = vsyncpa %s839, 1
    %841 = vsyncpa [#allocation5], 1
    %s842 = scalar_lea.sflag [#allocation5], 1
    %843 = vsyncpa %s842, 1
    %844 = vsyncpa [#allocation8], 1
    %s845 = scalar_lea.sflag [#allocation8], 1
    %846 = vsyncpa %s845, 1

</llo_original>
